<compile_context>
chip_gen: v7x
topology: tpu7x:2x2x1
jax: 0.10.0
libtpu: 0.0.40
codegen_flags: <defaults>
</compile_context>

<pallas_src>
import functools

import jax
import jax.numpy as jnp
from jax.experimental import pallas as pl
from jax.experimental.pallas import tpu as pltpu

# MXU-native operand dtype for the matmuls; accumulation stays f32 via
# preferred_element_type.  Set to jnp.float32 for bit-closer numerics.
_MATMUL_DTYPE = jnp.bfloat16


def _causal_dilated_conv(xb, w_ref, b_ref, *, dilation, kernel_size):
    """Causal dilated conv (== Conv1d(padding=(K-1)*d) + Chomp1d), batched.

    xb:     (BT, L, Cin) activation already cast to the matmul dtype.
    w_ref:  (K, Cin, Cout) weight ref (matmul dtype), w[k] == torch w[:, :, k].T
    b_ref:  (1, Cout) f32 bias ref.
    Returns (BT, L, Cout) f32:
      out[b, t] = b + sum_k w[k] @ x[b, t - (K-1-k)*d],  x[b, t<0] == 0.
    """
    BT, L, cin = xb.shape
    cout = w_ref.shape[-1]

    acc = None
    for k in range(kernel_size):
        s = (kernel_size - 1 - k) * dilation  # causal shift of tap k
        if s >= L:
            continue  # tap entirely in the zero halo
        if s == 0:
            xs = xb
        else:
            # Shift down along time: zero rows enter at t < s (the causal halo).
            xs = jnp.concatenate(
                [jnp.zeros((BT, s, cin), xb.dtype), xb[:, : L - s, :]], axis=1
            )
        contrib = jnp.dot(
            xs.reshape(BT * L, cin),
            w_ref[k],
            preferred_element_type=jnp.float32,
        )
        acc = contrib if acc is None else acc + contrib
    if acc is None:  # degenerate: every tap out of range
        acc = jnp.zeros((BT * L, cout), jnp.float32)

    acc = acc + b_ref[...]  # (1, Cout) broadcasts over BT*L rows
    return acc.reshape(BT, L, cout)


def _build_tcn_kernel(block_meta, kernel_size):
    """Whole-network fused kernel for one batch tile.

    refs = (x_ref, <per-block weight/bias refs...>, o_ref).  All intermediate
    activations and the residual branch live in VMEM/vregs; only the input and
    the final output touch HBM.
    """

    def kernel(*refs):
        x_ref, o_ref = refs[0], refs[-1]
        p_refs = refs[1:-1]

        x = x_ref[...].astype(jnp.float32)  # (BT, L, C_in)
        i = 0
        for meta in block_meta:
            d = meta["dilation"]
            w1, b1, w2, b2 = p_refs[i], p_refs[i + 1], p_refs[i + 2], p_refs[i + 3]
            i += 4

            xb = x.astype(_MATMUL_DTYPE)  # one cast, reused by conv1 + residual
            # conv1 -> chomp -> ReLU   (dropout == identity in eval mode)
            h = jnp.maximum(
                _causal_dilated_conv(xb, w1, b1, dilation=d, kernel_size=kernel_size),
                0.0,
            )
            # conv2 -> chomp -> ReLU
            hb = h.astype(_MATMUL_DTYPE)
            y = jnp.maximum(
                _causal_dilated_conv(hb, w2, b2, dilation=d, kernel_size=kernel_size),
                0.0,
            )
            # residual branch: identity or 1x1 downsample conv
            if meta["has_down"]:
                wd, bd = p_refs[i], p_refs[i + 1]
                i += 2
                bt, ln, cin = x.shape
                res2d = (
                    jnp.dot(
                        xb.reshape(bt * ln, cin),
                        wd[0],
                        preferred_element_type=jnp.float32,
                    )
                    + bd[...]
                )
                res = res2d.reshape(bt, ln, -1)
            else:
                res = x
            x = jnp.maximum(y + res, 0.0)  # TemporalBlock output ReLU

        o_ref[...] = x.astype(o_ref.dtype)

    return kernel


def tcn_forward(x_ncl, params):
    """TemporalConvNet.forward.  x_ncl: (B, C, L) PyTorch layout -> (B, C_last, L)."""
    # TODO(synk): dropout layers are stochastic in train mode; identity here (eval).
    x = jnp.transpose(x_ncl, (0, 2, 1))  # channels-last (B, L, C): C is the lane dim
    B, L, C0 = x.shape
    K = params[0]["w1"].shape[0]

    # Batch tile: whole batch in one step when small; otherwise 8-row tiles
    # (padded) sharded across TensorCores via the "parallel" grid axis.
    BT = B if B <= 8 else 8
    Bp = pl.cdiv(B, BT) * BT
    if Bp != B:
        x = jnp.pad(x, ((0, Bp - B), (0, 0), (0, 0)))

    args = [x]
    in_specs = [pl.BlockSpec((BT, L, C0), lambda b: (b, 0, 0))]
    block_meta = []

    def add_const_input(arr):
        # Full-array block with a constant index_map: Pallas keeps it resident
        # in VMEM across the batch grid (no per-step re-DMA).
        args.append(arr)
        zeros = (0,) * arr.ndim
        in_specs.append(pl.BlockSpec(arr.shape, lambda b, _z=zeros: _z))

    for blk in params:
        # Weights pre-cast to the MXU dtype once, host-side; biases stay f32.
        add_const_input(blk["w1"].astype(_MATMUL_DTYPE))
        add_const_input(blk["b1"].reshape(1, -1).astype(jnp.float32))
        add_const_input(blk["w2"].astype(_MATMUL_DTYPE))
        add_const_input(blk["b2"].reshape(1, -1).astype(jnp.float32))
        has_down = "wd" in blk
        if has_down:
            add_const_input(blk["wd"].astype(_MATMUL_DTYPE))
            add_const_input(blk["bd"].reshape(1, -1).astype(jnp.float32))
        block_meta.append({"dilation": blk["dilation"], "has_down": has_down})

    C_last = params[-1]["w2"].shape[-1]
    out = pl.pallas_call(
        _build_tcn_kernel(block_meta, K),
        out_shape=jax.ShapeDtypeStruct((Bp, L, C_last), x.dtype),
        grid=(Bp // BT,),
        in_specs=in_specs,
        out_specs=pl.BlockSpec((BT, L, C_last), lambda b: (b, 0, 0)),
        compiler_params=pltpu.CompilerParams(dimension_semantics=("parallel",)),
    )(*args)
    if Bp != B:
        out = out[:B]
    return jnp.transpose(out, (0, 2, 1))  # back to (B, C, L)


def init_tcn_params(key, num_inputs, num_channels, kernel_size=2):
    """Deterministic parameter init matching the module's shapes.

    PyTorch Conv1d weight (Cout, Cin, K) is stored here as (K, Cin, Cout).
    Weights ~ N(0, 0.01) as in init_weights(); biases drawn deterministically
    (PyTorch's default uniform bias init differs, but any values exercise the
    same forward math).
    """
    params = []
    for i, out_ch in enumerate(num_channels):
        in_ch = num_inputs if i == 0 else num_channels[i - 1]
        key, k1, k2, k3, k4, k5, k6 = jax.random.split(key, 7)
        blk = {
            "dilation": 2 ** i,
            "w1": 0.01 * jax.random.normal(k1, (kernel_size, in_ch, out_ch), jnp.float32),
            "b1": 0.01 * jax.random.normal(k2, (out_ch,), jnp.float32),
            "w2": 0.01 * jax.random.normal(k3, (kernel_size, out_ch, out_ch), jnp.float32),
            "b2": 0.01 * jax.random.normal(k4, (out_ch,), jnp.float32),
        }
        if in_ch != out_ch:  # downsample 1x1 conv
            blk["wd"] = 0.01 * jax.random.normal(k5, (1, in_ch, out_ch), jnp.float32)
            blk["bd"] = 0.01 * jax.random.normal(k6, (out_ch,), jnp.float32)
        params.append(blk)
    return params


def tcn_reference(x_ncl, params):
    """Pure-JAX reference (lax.conv_general_dilated), f32 throughout."""

    def conv(x, w, b, d):
        k = w.shape[0]
        w_oik = jnp.transpose(w, (2, 1, 0))  # (Cout, Cin, K) == PyTorch layout
        y = jax.lax.conv_general_dilated(
            x, w_oik, window_strides=(1,), padding=[((k - 1) * d, 0)],
            rhs_dilation=(d,), dimension_numbers=("NCH", "OIH", "NCH"),
            precision=jax.lax.Precision.HIGHEST,
        )
        return y + b[None, :, None]

    x = x_ncl
    for blk in params:
        d = blk["dilation"]
        h = jax.nn.relu(conv(x, blk["w1"], blk["b1"], d))
        y = jax.nn.relu(conv(h, blk["w2"], blk["b2"], d))
        res = conv(x, blk["wd"], blk["bd"], 1) if "wd" in blk else x
        x = jax.nn.relu(y + res)
    return x


if __name__ == "__main__":
    key = jax.random.PRNGKey(0)
    kx, kp = jax.random.split(key)

    B, C_IN, L = 2, 4, 16
    NUM_CHANNELS = (8, 8)   # two TemporalBlocks: dilations 1, 2; first has 1x1 downsample
    KSIZE = 2

    x = jax.random.normal(kx, (B, C_IN, L), jnp.float32)  # PyTorch NCL layout
    params = init_tcn_params(kp, C_IN, NUM_CHANNELS, kernel_size=KSIZE)

    fwd = jax.jit(functools.partial(tcn_forward, params=params))
    out = fwd(x)
    jax.block_until_ready(out)

    assert out.shape == (B, NUM_CHANNELS[-1], L), out.shape
    assert bool(jnp.all(jnp.isfinite(out)))
    assert bool(jnp.all(out >= 0.0))  # final ReLU

    # Numerical check vs. pure-JAX f32 reference (bf16 MXU operands -> loose tol).
    ref = tcn_reference(x, params)
    assert bool(jnp.allclose(out, ref, atol=2e-3, rtol=2e-2)), float(
        jnp.max(jnp.abs(out - ref))
    )

    print("KERNEL_OK")
</pallas_src>

<mosaic_0001>
module attributes {stable_mosaic.version = 11 : i64} {
  func.func @kernel(%arg0: i32, %arg1: memref<2x16x4xf32, #tpu.memory_space<vmem>>, %arg2: memref<2x4x8xbf16, #tpu.memory_space<vmem>>, %arg3: memref<1x8xf32, #tpu.memory_space<vmem>>, %arg4: memref<2x8x8xbf16, #tpu.memory_space<vmem>>, %arg5: memref<1x8xf32, #tpu.memory_space<vmem>>, %arg6: memref<1x4x8xbf16, #tpu.memory_space<vmem>>, %arg7: memref<1x8xf32, #tpu.memory_space<vmem>>, %arg8: memref<2x8x8xbf16, #tpu.memory_space<vmem>>, %arg9: memref<1x8xf32, #tpu.memory_space<vmem>>, %arg10: memref<2x8x8xbf16, #tpu.memory_space<vmem>>, %arg11: memref<1x8xf32, #tpu.memory_space<vmem>>, %arg12: memref<2x16x8xf32, #tpu.memory_space<vmem>>) attributes {dimension_semantics = [#tpu.dimension_semantics<parallel>], iteration_bounds = array<i64: 1>, scalar_prefetch = 0 : i64, scratch_operands = 0 : i64, tpu.core_type = #tpu.core_type<tc>, window_params = [{transform_indices = @transform_0, window_bounds = array<i64: 2, 16, 4>}, {pipeline_mode = #tpu.pipeline_mode<synchronous>, transform_indices = @transform_1, window_bounds = array<i64: 2, 4, 8>}, {pipeline_mode = #tpu.pipeline_mode<synchronous>, transform_indices = @transform_2, window_bounds = array<i64: 1, 8>}, {pipeline_mode = #tpu.pipeline_mode<synchronous>, transform_indices = @transform_3, window_bounds = array<i64: 2, 8, 8>}, {pipeline_mode = #tpu.pipeline_mode<synchronous>, transform_indices = @transform_4, window_bounds = array<i64: 1, 8>}, {pipeline_mode = #tpu.pipeline_mode<synchronous>, transform_indices = @transform_5, window_bounds = array<i64: 1, 4, 8>}, {pipeline_mode = #tpu.pipeline_mode<synchronous>, transform_indices = @transform_6, window_bounds = array<i64: 1, 8>}, {pipeline_mode = #tpu.pipeline_mode<synchronous>, transform_indices = @transform_7, window_bounds = array<i64: 2, 8, 8>}, {pipeline_mode = #tpu.pipeline_mode<synchronous>, transform_indices = @transform_8, window_bounds = array<i64: 1, 8>}, {pipeline_mode = #tpu.pipeline_mode<synchronous>, transform_indices = @transform_9, window_bounds = array<i64: 2, 8, 8>}, {pipeline_mode = #tpu.pipeline_mode<synchronous>, transform_indices = @transform_10, window_bounds = array<i64: 1, 8>}, {transform_indices = @transform_11, window_bounds = array<i64: 2, 16, 8>}]} {
    %c0 = arith.constant 0 : index
    %c0_0 = arith.constant 0 : index
    %c0_1 = arith.constant 0 : index
    %0 = vector.load %arg1[%c0, %c0_0, %c0_1] : memref<2x16x4xf32, #tpu.memory_space<vmem>>, vector<2x16x4xf32>
    %1 = arith.truncf %0 : vector<2x16x4xf32> to vector<2x16x4xbf16>
    %cst = arith.constant 0.000000e+00 : bf16
    %2 = vector.broadcast %cst : bf16 to vector<2x1x4xbf16>
    %3 = vector.extract_strided_slice %1 {offsets = [0, 0, 0], sizes = [2, 15, 4], strides = [1, 1, 1]} : vector<2x16x4xbf16> to vector<2x15x4xbf16>
    %4 = tpu.concatenate %2, %3 in 1 : vector<2x1x4xbf16>, vector<2x15x4xbf16> -> vector<2x16x4xbf16>
    %5 = vector.shape_cast %4 : vector<2x16x4xbf16> to vector<32x4xbf16>
    %c0_2 = arith.constant 0 : index
    %c0_3 = arith.constant 0 : index
    %c0_4 = arith.constant 0 : index
    %6 = vector.load %arg2[%c0_2, %c0_3, %c0_4] : memref<2x4x8xbf16, #tpu.memory_space<vmem>>, vector<1x4x8xbf16>
    %7 = vector.shape_cast %6 : vector<1x4x8xbf16> to vector<4x8xbf16>
    %cst_5 = arith.constant dense<0.000000e+00> : vector<32x8xf32>
    %8 = tpu.matmul %5, %7, %cst_5 {dimension_numbers = #tpu.dot_dimension_numbers<[1], [0], [0], [1], [0, 0, 1, 1], [], []>} : vector<32x4xbf16>, vector<4x8xbf16>, vector<32x8xf32> -> vector<32x8xf32>
    %9 = vector.shape_cast %1 : vector<2x16x4xbf16> to vector<32x4xbf16>
    %c1 = arith.constant 1 : index
    %c0_6 = arith.constant 0 : index
    %c0_7 = arith.constant 0 : index
    %10 = vector.load %arg2[%c1, %c0_6, %c0_7] : memref<2x4x8xbf16, #tpu.memory_space<vmem>>, vector<1x4x8xbf16>
    %11 = vector.shape_cast %10 : vector<1x4x8xbf16> to vector<4x8xbf16>
    %cst_8 = arith.constant dense<0.000000e+00> : vector<32x8xf32>
    %12 = tpu.matmul %9, %11, %cst_8 {dimension_numbers = #tpu.dot_dimension_numbers<[1], [0], [0], [1], [0, 0, 1, 1], [], []>} : vector<32x4xbf16>, vector<4x8xbf16>, vector<32x8xf32> -> vector<32x8xf32>
    %13 = arith.addf %8, %12 : vector<32x8xf32>
    %c0_9 = arith.constant 0 : index
    %c0_10 = arith.constant 0 : index
    %14 = vector.load %arg3[%c0_9, %c0_10] : memref<1x8xf32, #tpu.memory_space<vmem>>, vector<1x8xf32>
    %15 = vector.broadcast %14 : vector<1x8xf32> to vector<32x8xf32>
    %16 = arith.addf %13, %15 : vector<32x8xf32>
    %17 = vector.shape_cast %16 : vector<32x8xf32> to vector<2x16x8xf32>
    %cst_11 = arith.constant 0.000000e+00 : f32
    %18 = vector.broadcast %cst_11 : f32 to vector<2x16x8xf32>
    %19 = arith.maximumf %17, %18 : vector<2x16x8xf32>
    %20 = arith.truncf %19 : vector<2x16x8xf32> to vector<2x16x8xbf16>
    %cst_12 = arith.constant 0.000000e+00 : bf16
    %21 = vector.broadcast %cst_12 : bf16 to vector<2x1x8xbf16>
    %22 = vector.extract_strided_slice %20 {offsets = [0, 0, 0], sizes = [2, 15, 8], strides = [1, 1, 1]} : vector<2x16x8xbf16> to vector<2x15x8xbf16>
    %23 = tpu.concatenate %21, %22 in 1 : vector<2x1x8xbf16>, vector<2x15x8xbf16> -> vector<2x16x8xbf16>
    %24 = vector.shape_cast %23 : vector<2x16x8xbf16> to vector<32x8xbf16>
    %c0_13 = arith.constant 0 : index
    %c0_14 = arith.constant 0 : index
    %c0_15 = arith.constant 0 : index
    %25 = vector.load %arg4[%c0_13, %c0_14, %c0_15] : memref<2x8x8xbf16, #tpu.memory_space<vmem>>, vector<1x8x8xbf16>
    %26 = vector.shape_cast %25 : vector<1x8x8xbf16> to vector<8x8xbf16>
    %cst_16 = arith.constant dense<0.000000e+00> : vector<32x8xf32>
    %27 = tpu.matmul %24, %26, %cst_16 {dimension_numbers = #tpu.dot_dimension_numbers<[1], [0], [0], [1], [0, 0, 1, 1], [], []>} : vector<32x8xbf16>, vector<8x8xbf16>, vector<32x8xf32> -> vector<32x8xf32>
    %28 = vector.shape_cast %20 : vector<2x16x8xbf16> to vector<32x8xbf16>
    %c1_17 = arith.constant 1 : index
    %c0_18 = arith.constant 0 : index
    %c0_19 = arith.constant 0 : index
    %29 = vector.load %arg4[%c1_17, %c0_18, %c0_19] : memref<2x8x8xbf16, #tpu.memory_space<vmem>>, vector<1x8x8xbf16>
    %30 = vector.shape_cast %29 : vector<1x8x8xbf16> to vector<8x8xbf16>
    %cst_20 = arith.constant dense<0.000000e+00> : vector<32x8xf32>
    %31 = tpu.matmul %28, %30, %cst_20 {dimension_numbers = #tpu.dot_dimension_numbers<[1], [0], [0], [1], [0, 0, 1, 1], [], []>} : vector<32x8xbf16>, vector<8x8xbf16>, vector<32x8xf32> -> vector<32x8xf32>
    %32 = arith.addf %27, %31 : vector<32x8xf32>
    %c0_21 = arith.constant 0 : index
    %c0_22 = arith.constant 0 : index
    %33 = vector.load %arg5[%c0_21, %c0_22] : memref<1x8xf32, #tpu.memory_space<vmem>>, vector<1x8xf32>
    %34 = vector.broadcast %33 : vector<1x8xf32> to vector<32x8xf32>
    %35 = arith.addf %32, %34 : vector<32x8xf32>
    %36 = vector.shape_cast %35 : vector<32x8xf32> to vector<2x16x8xf32>
    %cst_23 = arith.constant 0.000000e+00 : f32
    %37 = vector.broadcast %cst_23 : f32 to vector<2x16x8xf32>
    %38 = arith.maximumf %36, %37 : vector<2x16x8xf32>
    %39 = vector.shape_cast %1 : vector<2x16x4xbf16> to vector<32x4xbf16>
    %c0_24 = arith.constant 0 : index
    %c0_25 = arith.constant 0 : index
    %c0_26 = arith.constant 0 : index
    %40 = vector.load %arg6[%c0_24, %c0_25, %c0_26] : memref<1x4x8xbf16, #tpu.memory_space<vmem>>, vector<1x4x8xbf16>
    %41 = vector.shape_cast %40 : vector<1x4x8xbf16> to vector<4x8xbf16>
    %cst_27 = arith.constant dense<0.000000e+00> : vector<32x8xf32>
    %42 = tpu.matmul %39, %41, %cst_27 {dimension_numbers = #tpu.dot_dimension_numbers<[1], [0], [0], [1], [0, 0, 1, 1], [], []>} : vector<32x4xbf16>, vector<4x8xbf16>, vector<32x8xf32> -> vector<32x8xf32>
    %c0_28 = arith.constant 0 : index
    %c0_29 = arith.constant 0 : index
    %43 = vector.load %arg7[%c0_28, %c0_29] : memref<1x8xf32, #tpu.memory_space<vmem>>, vector<1x8xf32>
    %44 = vector.broadcast %43 : vector<1x8xf32> to vector<32x8xf32>
    %45 = arith.addf %42, %44 : vector<32x8xf32>
    %46 = vector.shape_cast %45 : vector<32x8xf32> to vector<2x16x8xf32>
    %47 = arith.addf %38, %46 : vector<2x16x8xf32>
    %cst_30 = arith.constant 0.000000e+00 : f32
    %48 = vector.broadcast %cst_30 : f32 to vector<2x16x8xf32>
    %49 = arith.maximumf %47, %48 : vector<2x16x8xf32>
    %50 = arith.truncf %49 : vector<2x16x8xf32> to vector<2x16x8xbf16>
    %cst_31 = arith.constant 0.000000e+00 : bf16
    %51 = vector.broadcast %cst_31 : bf16 to vector<2x2x8xbf16>
    %52 = vector.extract_strided_slice %50 {offsets = [0, 0, 0], sizes = [2, 14, 8], strides = [1, 1, 1]} : vector<2x16x8xbf16> to vector<2x14x8xbf16>
    %53 = tpu.concatenate %51, %52 in 1 : vector<2x2x8xbf16>, vector<2x14x8xbf16> -> vector<2x16x8xbf16>
    %54 = vector.shape_cast %53 : vector<2x16x8xbf16> to vector<32x8xbf16>
    %c0_32 = arith.constant 0 : index
    %c0_33 = arith.constant 0 : index
    %c0_34 = arith.constant 0 : index
    %55 = vector.load %arg8[%c0_32, %c0_33, %c0_34] : memref<2x8x8xbf16, #tpu.memory_space<vmem>>, vector<1x8x8xbf16>
    %56 = vector.shape_cast %55 : vector<1x8x8xbf16> to vector<8x8xbf16>
    %cst_35 = arith.constant dense<0.000000e+00> : vector<32x8xf32>
    %57 = tpu.matmul %54, %56, %cst_35 {dimension_numbers = #tpu.dot_dimension_numbers<[1], [0], [0], [1], [0, 0, 1, 1], [], []>} : vector<32x8xbf16>, vector<8x8xbf16>, vector<32x8xf32> -> vector<32x8xf32>
    %58 = vector.shape_cast %50 : vector<2x16x8xbf16> to vector<32x8xbf16>
    %c1_36 = arith.constant 1 : index
    %c0_37 = arith.constant 0 : index
    %c0_38 = arith.constant 0 : index
    %59 = vector.load %arg8[%c1_36, %c0_37, %c0_38] : memref<2x8x8xbf16, #tpu.memory_space<vmem>>, vector<1x8x8xbf16>
    %60 = vector.shape_cast %59 : vector<1x8x8xbf16> to vector<8x8xbf16>
    %cst_39 = arith.constant dense<0.000000e+00> : vector<32x8xf32>
    %61 = tpu.matmul %58, %60, %cst_39 {dimension_numbers = #tpu.dot_dimension_numbers<[1], [0], [0], [1], [0, 0, 1, 1], [], []>} : vector<32x8xbf16>, vector<8x8xbf16>, vector<32x8xf32> -> vector<32x8xf32>
    %62 = arith.addf %57, %61 : vector<32x8xf32>
    %c0_40 = arith.constant 0 : index
    %c0_41 = arith.constant 0 : index
    %63 = vector.load %arg9[%c0_40, %c0_41] : memref<1x8xf32, #tpu.memory_space<vmem>>, vector<1x8xf32>
    %64 = vector.broadcast %63 : vector<1x8xf32> to vector<32x8xf32>
    %65 = arith.addf %62, %64 : vector<32x8xf32>
    %66 = vector.shape_cast %65 : vector<32x8xf32> to vector<2x16x8xf32>
    %cst_42 = arith.constant 0.000000e+00 : f32
    %67 = vector.broadcast %cst_42 : f32 to vector<2x16x8xf32>
    %68 = arith.maximumf %66, %67 : vector<2x16x8xf32>
    %69 = arith.truncf %68 : vector<2x16x8xf32> to vector<2x16x8xbf16>
    %cst_43 = arith.constant 0.000000e+00 : bf16
    %70 = vector.broadcast %cst_43 : bf16 to vector<2x2x8xbf16>
    %71 = vector.extract_strided_slice %69 {offsets = [0, 0, 0], sizes = [2, 14, 8], strides = [1, 1, 1]} : vector<2x16x8xbf16> to vector<2x14x8xbf16>
    %72 = tpu.concatenate %70, %71 in 1 : vector<2x2x8xbf16>, vector<2x14x8xbf16> -> vector<2x16x8xbf16>
    %73 = vector.shape_cast %72 : vector<2x16x8xbf16> to vector<32x8xbf16>
    %c0_44 = arith.constant 0 : index
    %c0_45 = arith.constant 0 : index
    %c0_46 = arith.constant 0 : index
    %74 = vector.load %arg10[%c0_44, %c0_45, %c0_46] : memref<2x8x8xbf16, #tpu.memory_space<vmem>>, vector<1x8x8xbf16>
    %75 = vector.shape_cast %74 : vector<1x8x8xbf16> to vector<8x8xbf16>
    %cst_47 = arith.constant dense<0.000000e+00> : vector<32x8xf32>
    %76 = tpu.matmul %73, %75, %cst_47 {dimension_numbers = #tpu.dot_dimension_numbers<[1], [0], [0], [1], [0, 0, 1, 1], [], []>} : vector<32x8xbf16>, vector<8x8xbf16>, vector<32x8xf32> -> vector<32x8xf32>
    %77 = vector.shape_cast %69 : vector<2x16x8xbf16> to vector<32x8xbf16>
    %c1_48 = arith.constant 1 : index
    %c0_49 = arith.constant 0 : index
    %c0_50 = arith.constant 0 : index
    %78 = vector.load %arg10[%c1_48, %c0_49, %c0_50] : memref<2x8x8xbf16, #tpu.memory_space<vmem>>, vector<1x8x8xbf16>
    %79 = vector.shape_cast %78 : vector<1x8x8xbf16> to vector<8x8xbf16>
    %cst_51 = arith.constant dense<0.000000e+00> : vector<32x8xf32>
    %80 = tpu.matmul %77, %79, %cst_51 {dimension_numbers = #tpu.dot_dimension_numbers<[1], [0], [0], [1], [0, 0, 1, 1], [], []>} : vector<32x8xbf16>, vector<8x8xbf16>, vector<32x8xf32> -> vector<32x8xf32>
    %81 = arith.addf %76, %80 : vector<32x8xf32>
    %c0_52 = arith.constant 0 : index
    %c0_53 = arith.constant 0 : index
    %82 = vector.load %arg11[%c0_52, %c0_53] : memref<1x8xf32, #tpu.memory_space<vmem>>, vector<1x8xf32>
    %83 = vector.broadcast %82 : vector<1x8xf32> to vector<32x8xf32>
    %84 = arith.addf %81, %83 : vector<32x8xf32>
    %85 = vector.shape_cast %84 : vector<32x8xf32> to vector<2x16x8xf32>
    %cst_54 = arith.constant 0.000000e+00 : f32
    %86 = vector.broadcast %cst_54 : f32 to vector<2x16x8xf32>
    %87 = arith.maximumf %85, %86 : vector<2x16x8xf32>
    %88 = arith.addf %87, %49 : vector<2x16x8xf32>
    %cst_55 = arith.constant 0.000000e+00 : f32
    %89 = vector.broadcast %cst_55 : f32 to vector<2x16x8xf32>
    %90 = arith.maximumf %88, %89 : vector<2x16x8xf32>
    %c0_56 = arith.constant 0 : index
    %c0_57 = arith.constant 0 : index
    %c0_58 = arith.constant 0 : index
    %91 = vector.load %arg12[%c0_56, %c0_57, %c0_58] : memref<2x16x8xf32, #tpu.memory_space<vmem>>, vector<2x16x8xf32>
    tpu.vector_store %arg12[%c0_56, %c0_57, %c0_58], %90 {strides = array<i32>} : memref<2x16x8xf32, #tpu.memory_space<vmem>>, vector<2x16x8xf32>,
    return
  }
  func.func @transform_0(%arg0: i32) -> (i32, i32, i32) {
    %c0_i32 = arith.constant 0 : i32
    %c0_i32_0 = arith.constant 0 : i32
    %c0_i32_1 = arith.constant 0 : i32
    return %arg0, %c0_i32, %c0_i32_0 : i32, i32, i32
  }
  func.func @transform_1(%arg0: i32) -> (i32, i32, i32) {
    %c0_i32 = arith.constant 0 : i32
    %c0_i32_0 = arith.constant 0 : i32
    %c0_i32_1 = arith.constant 0 : i32
    %c0_i32_2 = arith.constant 0 : i32
    return %c0_i32, %c0_i32_0, %c0_i32_1 : i32, i32, i32
  }
  func.func @transform_2(%arg0: i32) -> (i32, i32) {
    %c0_i32 = arith.constant 0 : i32
    %c0_i32_0 = arith.constant 0 : i32
    %c0_i32_1 = arith.constant 0 : i32
    return %c0_i32, %c0_i32_0 : i32, i32
  }
  func.func @transform_3(%arg0: i32) -> (i32, i32, i32) {
    %c0_i32 = arith.constant 0 : i32
    %c0_i32_0 = arith.constant 0 : i32
    %c0_i32_1 = arith.constant 0 : i32
    %c0_i32_2 = arith.constant 0 : i32
    return %c0_i32, %c0_i32_0, %c0_i32_1 : i32, i32, i32
  }
  func.func @transform_4(%arg0: i32) -> (i32, i32) {
    %c0_i32 = arith.constant 0 : i32
    %c0_i32_0 = arith.constant 0 : i32
    %c0_i32_1 = arith.constant 0 : i32
    return %c0_i32, %c0_i32_0 : i32, i32
  }
  func.func @transform_5(%arg0: i32) -> (i32, i32, i32) {
    %c0_i32 = arith.constant 0 : i32
    %c0_i32_0 = arith.constant 0 : i32
    %c0_i32_1 = arith.constant 0 : i32
    %c0_i32_2 = arith.constant 0 : i32
    return %c0_i32, %c0_i32_0, %c0_i32_1 : i32, i32, i32
  }
  func.func @transform_6(%arg0: i32) -> (i32, i32) {
    %c0_i32 = arith.constant 0 : i32
    %c0_i32_0 = arith.constant 0 : i32
    %c0_i32_1 = arith.constant 0 : i32
    return %c0_i32, %c0_i32_0 : i32, i32
  }
  func.func @transform_7(%arg0: i32) -> (i32, i32, i32) {
    %c0_i32 = arith.constant 0 : i32
    %c0_i32_0 = arith.constant 0 : i32
    %c0_i32_1 = arith.constant 0 : i32
    %c0_i32_2 = arith.constant 0 : i32
    return %c0_i32, %c0_i32_0, %c0_i32_1 : i32, i32, i32
  }
  func.func @transform_8(%arg0: i32) -> (i32, i32) {
    %c0_i32 = arith.constant 0 : i32
    %c0_i32_0 = arith.constant 0 : i32
    %c0_i32_1 = arith.constant 0 : i32
    return %c0_i32, %c0_i32_0 : i32, i32
  }
  func.func @transform_9(%arg0: i32) -> (i32, i32, i32) {
    %c0_i32 = arith.constant 0 : i32
    %c0_i32_0 = arith.constant 0 : i32
    %c0_i32_1 = arith.constant 0 : i32
    %c0_i32_2 = arith.constant 0 : i32
    return %c0_i32, %c0_i32_0, %c0_i32_1 : i32, i32, i32
  }
  func.func @transform_10(%arg0: i32) -> (i32, i32) {
    %c0_i32 = arith.constant 0 : i32
    %c0_i32_0 = arith.constant 0 : i32
    %c0_i32_1 = arith.constant 0 : i32
    return %c0_i32, %c0_i32_0 : i32, i32
  }
  func.func @transform_11(%arg0: i32) -> (i32, i32, i32) {
    %c0_i32 = arith.constant 0 : i32
    %c0_i32_0 = arith.constant 0 : i32
    %c0_i32_1 = arith.constant 0 : i32
    return %arg0, %c0_i32, %c0_i32_0 : i32, i32, i32
  }
}

</mosaic_0001>

<llo_original>
// kernel: tcn_forward.1
$region0: #{tcn_forward.1}
  #allocation0 [shape = 'u32[]', space=smem, size = 0x4, offset = 0x4, fixed_abs, tag = 'smem constant byte address 0x4 - core index']
  #allocation1 [shape = 'u32[144,128]{1,0:T(1,128)}', space=vmem, size = 0x12000, scoped, tag = 'internal scratch']
  %s0 = inlined_call_operand.vmem [shape: f32[2,16,4], index: 0, kind: input, shape index: {}]
  %s1 = inlined_call_operand.vmem [shape: bf16[2,4,8], index: 1, kind: input, shape index: {}]
  %s2 = inlined_call_operand.vmem [shape: f32[1,8], index: 2, kind: input, shape index: {}]
  %s3 = inlined_call_operand.vmem [shape: bf16[2,8,8], index: 3, kind: input, shape index: {}]
  %s4 = inlined_call_operand.vmem [shape: f32[1,8], index: 4, kind: input, shape index: {}]
  %s5 = inlined_call_operand.vmem [shape: bf16[1,4,8], index: 5, kind: input, shape index: {}]
  %s6 = inlined_call_operand.vmem [shape: f32[1,8], index: 6, kind: input, shape index: {}]
  %s7 = inlined_call_operand.vmem [shape: bf16[2,8,8], index: 7, kind: input, shape index: {}]
  %s8 = inlined_call_operand.vmem [shape: f32[1,8], index: 8, kind: input, shape index: {}]
  %s9 = inlined_call_operand.vmem [shape: bf16[2,8,8], index: 9, kind: input, shape index: {}]
  %s10 = inlined_call_operand.vmem [shape: f32[1,8], index: 10, kind: input, shape index: {}]
  %s11 = inlined_call_operand.vmem [shape: f32[2,16,8], index: 11, kind: output, shape index: {}]
  %s12 = sld [smem:[#allocation0]]
  $region54: #{tcn_forward.1} parent=0
    _
  %s14 = ssub.s32 1, %s12
  %s15 = scalar_select 0, %s14, %s12
  // Predicated region
  $region2: #{tcn_forward.1} parent=0 // pred_check
    _
  $region3: #{tcn_forward.1} parent=0 // pred_check_branch
    %17 = sbr.rel (0) target = $region5
  $region4: #{tcn_forward.1} parent=0 // pred_region
    _
  $region5: #{tcn_forward.1} parent=0 // pred_fallthru
    _
  // Predicated region
  $region6: #{tcn_forward.1} parent=0 // pred_check
    _
  $region7: #{tcn_forward.1} parent=0 // pred_check_branch
    %19 = sbr.rel (0) target = $region9
  $region8: #{tcn_forward.1} parent=0 // pred_region
    _
  $region9: #{tcn_forward.1} parent=0 // pred_fallthru
    _
  // Predicated region
  $region10: #{tcn_forward.1} parent=0 // pred_check
    _
  $region11: #{tcn_forward.1} parent=0 // pred_check_branch
    %21 = sbr.rel (0) target = $region13
  $region12: #{tcn_forward.1} parent=0 // pred_region
    _
  $region13: #{tcn_forward.1} parent=0 // pred_fallthru
    _
  // Predicated region
  $region14: #{tcn_forward.1} parent=0 // pred_check
    _
  $region15: #{tcn_forward.1} parent=0 // pred_check_branch
    %23 = sbr.rel (0) target = $region17
  $region16: #{tcn_forward.1} parent=0 // pred_region
    _
  $region17: #{tcn_forward.1} parent=0 // pred_fallthru
    _
  // Predicated region
  $region18: #{tcn_forward.1} parent=0 // pred_check
    _
  $region19: #{tcn_forward.1} parent=0 // pred_check_branch
    %25 = sbr.rel (0) target = $region21
  $region20: #{tcn_forward.1} parent=0 // pred_region
    _
  $region21: #{tcn_forward.1} parent=0 // pred_fallthru
    _
  // Predicated region
  $region22: #{tcn_forward.1} parent=0 // pred_check
    _
  $region23: #{tcn_forward.1} parent=0 // pred_check_branch
    %27 = sbr.rel (0) target = $region25
  $region24: #{tcn_forward.1} parent=0 // pred_region
    _
  $region25: #{tcn_forward.1} parent=0 // pred_fallthru
    _
  // Predicated region
  $region26: #{tcn_forward.1} parent=0 // pred_check
    _
  $region27: #{tcn_forward.1} parent=0 // pred_check_branch
    %29 = sbr.rel (0) target = $region29
  $region28: #{tcn_forward.1} parent=0 // pred_region
    _
  $region29: #{tcn_forward.1} parent=0 // pred_fallthru
    _
  // Predicated region
  $region30: #{tcn_forward.1} parent=0 // pred_check
    _
  $region31: #{tcn_forward.1} parent=0 // pred_check_branch
    %31 = sbr.rel (0) target = $region33
  $region32: #{tcn_forward.1} parent=0 // pred_region
    _
  $region33: #{tcn_forward.1} parent=0 // pred_fallthru
    _
  // Predicated region
  $region34: #{tcn_forward.1} parent=0 // pred_check
    _
  $region35: #{tcn_forward.1} parent=0 // pred_check_branch
    %33 = sbr.rel (0) target = $region37
  $region36: #{tcn_forward.1} parent=0 // pred_region
    _
  $region37: #{tcn_forward.1} parent=0 // pred_fallthru
    _
  // Predicated region
  $region38: #{tcn_forward.1} parent=0 // pred_check
    _
  $region39: #{tcn_forward.1} parent=0 // pred_check_branch
    %35 = sbr.rel (0) target = $region41
  $region40: #{tcn_forward.1} parent=0 // pred_region
    _
  $region41: #{tcn_forward.1} parent=0 // pred_fallthru
    _
  // Predicated region
  $region42: #{tcn_forward.1} parent=0 // pred_check
    _
  $region43: #{tcn_forward.1} parent=0 // pred_check_branch
    %37 = sbr.rel (0) target = $region45
  $region44: #{tcn_forward.1} parent=0 // pred_region
    _
  $region45: #{tcn_forward.1} parent=0 // pred_fallthru
    _
  %v39 = vld [vmem:[%s0] sm:$0xff]
  %v40 = vld [vmem:[%s0 + $0x8] sm:$0xff]
  %v41 = vld [vmem:[%s0 + $0x10] sm:$0xff]
  %v42 = vld [vmem:[%s0 + $0x18] sm:$0xff]
  %v43 = vpack.c.bf16 %v40, %v39
  %v44 = vpack.c.bf16 %v42, %v41
  %v46 = vshrl.u32 %v43, 16
  %v48 = vrot.slane %v46, 7
  %v49 = vshll.u32 %v43, 16
  %v51 = vor.u32 %v48, %v49
  %v53 = vshrl.u32 %v44, 16
  %v55 = vrot.slane %v53, 7
  %v56 = vshll.u32 %v44, 16
  %v58 = vor.u32 %v55, %v56
  %vm61 = vcmask 1040384
  %vm62 = vsmask.f32 256
  %vm63 = vmand %vm61, %vm62
  %v64 = vsel %vm63, 0, %v51
  %v65 = vsel %vm63, 0, %v58
  %v66 = vld [vmem:[%s1] sm:$0x3]
  %s67 = scalar_lea.vmem %s1, 2
  %v68 = vld [vmem:[%s67] sm:$0x3]
  %vm69 = vcmask 31744
  %v70 = vsel %vm69, %v43, 0
  %v72 = vsel %vm69, %v44, 0
  %vm74 = vcmask 1041408
  %v76 = vsel %vm74, %v68, 0
  %78 = vmatprep.subr.bf16.mxu0 0
  %79 = vmatpush1.bf16.msra.mxu0 %v76
  %80 = vmatprep.subr.bf16.mxu0 0
  %81 = vmatpush1.bf16.msra.mxu0 0
  %82 = vmatprep.subr.bf16.mxu0 0
  %83 = vmatpush1.bf16.msra.mxu0 0
  %84 = vmatprep.subr.bf16.mxu0 0
  %85 = vmatpush1.bf16.msra.mxu0 0
  %86 = vmatprep.subr.bf16.mxu0 0
  %87 = vmatpush1.bf16.msra.mxu0 0
  %88 = vmatprep.subr.bf16.mxu0 0
  %89 = vmatpush1.bf16.msra.mxu0 0
  %90 = vmatprep.subr.bf16.mxu0 0
  %91 = vmatpush1.bf16.msra.mxu0 0
  %92 = vmatprep.subr.bf16.mxu0 0
  %93 = vmatpush1.bf16.msra.mxu0 0
  %94 = vmatprep.subr.bf16.mxu0 0
  %95 = vmatpush1.bf16.msra.mxu0 0
  %96 = vmatprep.subr.bf16.mxu0 0
  %97 = vmatpush1.bf16.msra.mxu0 0
  %98 = vmatprep.subr.bf16.mxu0 0
  %99 = vmatpush1.bf16.msra.mxu0 0
  %100 = vmatprep.subr.bf16.mxu0 0
  %101 = vmatpush1.bf16.msra.mxu0 0
  %102 = vmatprep.subr.bf16.mxu0 0
  %103 = vmatpush1.bf16.msra.mxu0 0
  %104 = vmatprep.subr.bf16.mxu0 0
  %105 = vmatpush1.bf16.msra.mxu0 0
  %106 = vmatprep.subr.bf16.mxu0 0
  %107 = vmatpush1.bf16.msra.mxu0 0
  %108 = vmatprep.subr.bf16.mxu0 0
  %109 = vmatpush1.bf16.msra.mxu0 0
  %110 = vmatprep.mubr.bf16.mxu0 0
  %111 = vmatmul.mubr.bf16.gmra.mrb[0].mxu0 %v70
  %v112 = vpop.f32.mrb[0].mxu0
  %v113 = vadd.f32 0.0, %v112
  %v114 = vpop.f32.mrb[0].mxu0
  %v115 = vpop.f32.mrb[0].mxu0
  %v116 = vadd.f32 0.0, %v115
  %v117 = vpop.f32.mrb[0].mxu0
  %118 = vmatprep.mubr.bf16.mxu0 0
  %119 = vmatmul.mubr.bf16.gmra.mrb[0].mxu0 %v72
  %v120 = vpop.f32.mrb[0].mxu0
  %v121 = vadd.f32 0.0, %v120
  %v122 = vpop.f32.mrb[0].mxu0
  %v123 = vpop.f32.mrb[0].mxu0
  %v124 = vadd.f32 0.0, %v123
  %v125 = vpop.f32.mrb[0].mxu0
  %126 = vdwg.mxu0
  %v128 = vsel %vm69, %v64, 0
  %v131 = vsel %vm69, %v65, 0
  %v134 = vsel %vm74, %v66, 0
  %136 = vmatprep.subr.bf16.mxu0 0
  %137 = vmatpush1.bf16.msra.mxu0 %v134
  %138 = vmatprep.subr.bf16.mxu0 0
  %139 = vmatpush1.bf16.msra.mxu0 0
  %140 = vmatprep.subr.bf16.mxu0 0
  %141 = vmatpush1.bf16.msra.mxu0 0
  %142 = vmatprep.subr.bf16.mxu0 0
  %143 = vmatpush1.bf16.msra.mxu0 0
  %144 = vmatprep.subr.bf16.mxu0 0
  %145 = vmatpush1.bf16.msra.mxu0 0
  %146 = vmatprep.subr.bf16.mxu0 0
  %147 = vmatpush1.bf16.msra.mxu0 0
  %148 = vmatprep.subr.bf16.mxu0 0
  %149 = vmatpush1.bf16.msra.mxu0 0
  %150 = vmatprep.subr.bf16.mxu0 0
  %151 = vmatpush1.bf16.msra.mxu0 0
  %152 = vmatprep.subr.bf16.mxu0 0
  %153 = vmatpush1.bf16.msra.mxu0 0
  %154 = vmatprep.subr.bf16.mxu0 0
  %155 = vmatpush1.bf16.msra.mxu0 0
  %156 = vmatprep.subr.bf16.mxu0 0
  %157 = vmatpush1.bf16.msra.mxu0 0
  %158 = vmatprep.subr.bf16.mxu0 0
  %159 = vmatpush1.bf16.msra.mxu0 0
  %160 = vmatprep.subr.bf16.mxu0 0
  %161 = vmatpush1.bf16.msra.mxu0 0
  %162 = vmatprep.subr.bf16.mxu0 0
  %163 = vmatpush1.bf16.msra.mxu0 0
  %164 = vmatprep.subr.bf16.mxu0 0
  %165 = vmatpush1.bf16.msra.mxu0 0
  %166 = vmatprep.subr.bf16.mxu0 0
  %167 = vmatpush1.bf16.msra.mxu0 0
  %168 = vmatprep.mubr.bf16.mxu0 0
  %169 = vmatmul.mubr.bf16.gmra.mrb[0].mxu0 %v128
  %v170 = vpop.f32.mrb[0].mxu0
  %v171 = vadd.f32 %v113, %v170
  %v172 = vpop.f32.mrb[0].mxu0
  %v173 = vpop.f32.mrb[0].mxu0
  %v174 = vadd.f32 %v116, %v173
  %v175 = vpop.f32.mrb[0].mxu0
  %176 = vmatprep.mubr.bf16.mxu0 0
  %177 = vmatmul.mubr.bf16.gmra.mrb[0].mxu0 %v131
  %v178 = vpop.f32.mrb[0].mxu0
  %v179 = vadd.f32 %v121, %v178
  %v180 = vpop.f32.mrb[0].mxu0
  %v181 = vpop.f32.mrb[0].mxu0
  %v182 = vadd.f32 %v124, %v181
  %v183 = vpop.f32.mrb[0].mxu0
  %184 = vdwg.mxu0
  %v185 = vld [vmem:[%s2] sm:$0x1]
  %v187 = vlaneseq
  %v188 = vshrl.u32 %v187, 7
  %v189 = vsub.s32 0, %v188
  %v190 = vrot.slane %v185, %v189
  %v192 = vadd.f32 %v171, %v190
  %v193 = vadd.f32 %v174, %v190
  %v194 = vadd.f32 %v179, %v190
  %v195 = vadd.f32 %v182, %v190
  %v196 = vmax.f32 %v192, 0.0
  %v197 = vmax.f32 %v193, 0.0
  %v198 = vmax.f32 %v194, 0.0
  %v199 = vmax.f32 %v195, 0.0
  %v200 = vpack.c.bf16 %v197, %v196
  %v201 = vpack.c.bf16 %v199, %v198
  %v203 = vshrl.u32 %v200, 16
  %v205 = vrot.slane %v203, 7
  %v206 = vshll.u32 %v200, 16
  %v208 = vor.u32 %v205, %v206
  %v210 = vshrl.u32 %v201, 16
  %v212 = vrot.slane %v210, 7
  %v213 = vshll.u32 %v201, 16
  %v215 = vor.u32 %v212, %v213
  %v218 = vsel %vm63, 0, %v208
  %v219 = vsel %vm63, 0, %v215
  %v220 = vld [vmem:[%s3] sm:$0xf]
  %s221 = scalar_lea.vmem %s3, 4
  %v222 = vld [vmem:[%s221] sm:$0xf]
  %vm223 = vcmask 64512
  %v224 = vsel %vm223, %v200, 0
  %v226 = vsel %vm223, %v201, 0
  %vm228 = vcmask 1043456
  %v230 = vsel %vm228, %v222, 0
  %232 = vmatprep.subr.bf16.mxu0 0
  %233 = vmatpush1.bf16.msra.mxu0 %v230
  %234 = vmatprep.subr.bf16.mxu0 0
  %235 = vmatpush1.bf16.msra.mxu0 0
  %236 = vmatprep.subr.bf16.mxu0 0
  %237 = vmatpush1.bf16.msra.mxu0 0
  %238 = vmatprep.subr.bf16.mxu0 0
  %239 = vmatpush1.bf16.msra.mxu0 0
  %240 = vmatprep.subr.bf16.mxu0 0
  %241 = vmatpush1.bf16.msra.mxu0 0
  %242 = vmatprep.subr.bf16.mxu0 0
  %243 = vmatpush1.bf16.msra.mxu0 0
  %244 = vmatprep.subr.bf16.mxu0 0
  %245 = vmatpush1.bf16.msra.mxu0 0
  %246 = vmatprep.subr.bf16.mxu0 0
  %247 = vmatpush1.bf16.msra.mxu0 0
  %248 = vmatprep.subr.bf16.mxu0 0
  %249 = vmatpush1.bf16.msra.mxu0 0
  %250 = vmatprep.subr.bf16.mxu0 0
  %251 = vmatpush1.bf16.msra.mxu0 0
  %252 = vmatprep.subr.bf16.mxu0 0
  %253 = vmatpush1.bf16.msra.mxu0 0
  %254 = vmatprep.subr.bf16.mxu0 0
  %255 = vmatpush1.bf16.msra.mxu0 0
  %256 = vmatprep.subr.bf16.mxu0 0
  %257 = vmatpush1.bf16.msra.mxu0 0
  %258 = vmatprep.subr.bf16.mxu0 0
  %259 = vmatpush1.bf16.msra.mxu0 0
  %260 = vmatprep.subr.bf16.mxu0 0
  %261 = vmatpush1.bf16.msra.mxu0 0
  %262 = vmatprep.subr.bf16.mxu0 0
  %263 = vmatpush1.bf16.msra.mxu0 0
  %264 = vmatprep.mubr.bf16.mxu0 0
  %265 = vmatmul.mubr.bf16.gmra.mrb[0].mxu0 %v224
  %v266 = vpop.f32.mrb[0].mxu0
  %v267 = vadd.f32 0.0, %v266
  %v268 = vpop.f32.mrb[0].mxu0
  %v269 = vpop.f32.mrb[0].mxu0
  %v270 = vadd.f32 0.0, %v269
  %v271 = vpop.f32.mrb[0].mxu0
  %272 = vmatprep.mubr.bf16.mxu0 0
  %273 = vmatmul.mubr.bf16.gmra.mrb[0].mxu0 %v226
  %v274 = vpop.f32.mrb[0].mxu0
  %v275 = vadd.f32 0.0, %v274
  %v276 = vpop.f32.mrb[0].mxu0
  %v277 = vpop.f32.mrb[0].mxu0
  %v278 = vadd.f32 0.0, %v277
  %v279 = vpop.f32.mrb[0].mxu0
  %280 = vdwg.mxu0
  %v282 = vsel %vm223, %v218, 0
  %v285 = vsel %vm223, %v219, 0
  %v288 = vsel %vm228, %v220, 0
  %290 = vmatprep.subr.bf16.mxu0 0
  %291 = vmatpush1.bf16.msra.mxu0 %v288
  %292 = vmatprep.subr.bf16.mxu0 0
  %293 = vmatpush1.bf16.msra.mxu0 0
  %294 = vmatprep.subr.bf16.mxu0 0
  %295 = vmatpush1.bf16.msra.mxu0 0
  %296 = vmatprep.subr.bf16.mxu0 0
  %297 = vmatpush1.bf16.msra.mxu0 0
  %298 = vmatprep.subr.bf16.mxu0 0
  %299 = vmatpush1.bf16.msra.mxu0 0
  %300 = vmatprep.subr.bf16.mxu0 0
  %301 = vmatpush1.bf16.msra.mxu0 0
  %302 = vmatprep.subr.bf16.mxu0 0
  %303 = vmatpush1.bf16.msra.mxu0 0
  %304 = vmatprep.subr.bf16.mxu0 0
  %305 = vmatpush1.bf16.msra.mxu0 0
  %306 = vmatprep.subr.bf16.mxu0 0
  %307 = vmatpush1.bf16.msra.mxu0 0
  %308 = vmatprep.subr.bf16.mxu0 0
  %309 = vmatpush1.bf16.msra.mxu0 0
  %310 = vmatprep.subr.bf16.mxu0 0
  %311 = vmatpush1.bf16.msra.mxu0 0
  %312 = vmatprep.subr.bf16.mxu0 0
  %313 = vmatpush1.bf16.msra.mxu0 0
  %314 = vmatprep.subr.bf16.mxu0 0
  %315 = vmatpush1.bf16.msra.mxu0 0
  %316 = vmatprep.subr.bf16.mxu0 0
  %317 = vmatpush1.bf16.msra.mxu0 0
  %318 = vmatprep.subr.bf16.mxu0 0
  %319 = vmatpush1.bf16.msra.mxu0 0
  %320 = vmatprep.subr.bf16.mxu0 0
  %321 = vmatpush1.bf16.msra.mxu0 0
  %322 = vmatprep.mubr.bf16.mxu0 0
  %323 = vmatmul.mubr.bf16.gmra.mrb[0].mxu0 %v282
  %v324 = vpop.f32.mrb[0].mxu0
  %v325 = vadd.f32 %v267, %v324
  %v326 = vpop.f32.mrb[0].mxu0
  %v327 = vpop.f32.mrb[0].mxu0
  %v328 = vadd.f32 %v270, %v327
  %v329 = vpop.f32.mrb[0].mxu0
  %330 = vmatprep.mubr.bf16.mxu0 0
  %331 = vmatmul.mubr.bf16.gmra.mrb[0].mxu0 %v285
  %v332 = vpop.f32.mrb[0].mxu0
  %v333 = vadd.f32 %v275, %v332
  %v334 = vpop.f32.mrb[0].mxu0
  %v335 = vpop.f32.mrb[0].mxu0
  %v336 = vadd.f32 %v278, %v335
  %v337 = vpop.f32.mrb[0].mxu0
  %338 = vdwg.mxu0
  %v339 = vld [vmem:[%s4] sm:$0x1]
  %v341 = vlaneseq
  %v342 = vshrl.u32 %v341, 7
  %v343 = vsub.s32 0, %v342
  %v344 = vrot.slane %v339, %v343
  %v346 = vadd.f32 %v325, %v344
  %v347 = vadd.f32 %v328, %v344
  %v348 = vadd.f32 %v333, %v344
  %v349 = vadd.f32 %v336, %v344
  %v350 = vmax.f32 %v346, 0.0
  %v351 = vmax.f32 %v347, 0.0
  %v352 = vmax.f32 %v348, 0.0
  %v353 = vmax.f32 %v349, 0.0
  %v354 = vld [vmem:[%s5] sm:$0x3]
  %v355 = vld [vmem:[%s6] sm:$0x1]
  %v357 = vlaneseq
  %v358 = vshrl.u32 %v357, 7
  %v359 = vsub.s32 0, %v358
  %v360 = vrot.slane %v355, %v359
  %v363 = vsel %vm74, %v354, 0
  %365 = vmatprep.subr.bf16.mxu0 0
  %366 = vmatpush1.bf16.msra.mxu0 %v363
  %367 = vmatprep.subr.bf16.mxu0 0
  %368 = vmatpush1.bf16.msra.mxu0 0
  %369 = vmatprep.subr.bf16.mxu0 0
  %370 = vmatpush1.bf16.msra.mxu0 0
  %371 = vmatprep.subr.bf16.mxu0 0
  %372 = vmatpush1.bf16.msra.mxu0 0
  %373 = vmatprep.subr.bf16.mxu0 0
  %374 = vmatpush1.bf16.msra.mxu0 0
  %375 = vmatprep.subr.bf16.mxu0 0
  %376 = vmatpush1.bf16.msra.mxu0 0
  %377 = vmatprep.subr.bf16.mxu0 0
  %378 = vmatpush1.bf16.msra.mxu0 0
  %379 = vmatprep.subr.bf16.mxu0 0
  %380 = vmatpush1.bf16.msra.mxu0 0
  %381 = vmatprep.subr.bf16.mxu0 0
  %382 = vmatpush1.bf16.msra.mxu0 0
  %383 = vmatprep.subr.bf16.mxu0 0
  %384 = vmatpush1.bf16.msra.mxu0 0
  %385 = vmatprep.subr.bf16.mxu0 0
  %386 = vmatpush1.bf16.msra.mxu0 0
  %387 = vmatprep.subr.bf16.mxu0 0
  %388 = vmatpush1.bf16.msra.mxu0 0
  %389 = vmatprep.subr.bf16.mxu0 0
  %390 = vmatpush1.bf16.msra.mxu0 0
  %391 = vmatprep.subr.bf16.mxu0 0
  %392 = vmatpush1.bf16.msra.mxu0 0
  %393 = vmatprep.subr.bf16.mxu0 0
  %394 = vmatpush1.bf16.msra.mxu0 0
  %395 = vmatprep.subr.bf16.mxu0 0
  %396 = vmatpush1.bf16.msra.mxu0 0
  %397 = vmatprep.mubr.bf16.mxu0 0
  %398 = vmatmul.mubr.bf16.gmra.mrb[0].mxu0 %v70
  %v399 = vpop.f32.mrb[0].mxu0
  %v400 = vadd.f32 %v360, %v399
  %v401 = vpop.f32.mrb[0].mxu0
  %v402 = vpop.f32.mrb[0].mxu0
  %v403 = vadd.f32 %v360, %v402
  %v404 = vpop.f32.mrb[0].mxu0
  %405 = vmatprep.mubr.bf16.mxu0 0
  %406 = vmatmul.mubr.bf16.gmra.mrb[0].mxu0 %v72
  %v407 = vpop.f32.mrb[0].mxu0
  %v408 = vadd.f32 %v360, %v407
  %v409 = vpop.f32.mrb[0].mxu0
  %v410 = vpop.f32.mrb[0].mxu0
  %v411 = vadd.f32 %v360, %v410
  %v412 = vpop.f32.mrb[0].mxu0
  %413 = vdwg.mxu0
  %v414 = vadd.f32 %v350, %v400
  %v415 = vadd.f32 %v351, %v403
  %v416 = vadd.f32 %v352, %v408
  %v417 = vadd.f32 %v353, %v411
  %v418 = vmax.f32 %v414, 0.0
  %v419 = vmax.f32 %v415, 0.0
  %v420 = vmax.f32 %v416, 0.0
  %v421 = vmax.f32 %v417, 0.0
  %v422 = vpack.c.bf16 %v419, %v418
  %v423 = vpack.c.bf16 %v421, %v420
  %v426 = vrot.slane %v422, 7
  %v427 = vrot.slane %v423, 7
  %vm428 = vcmask 1040384
  %v431 = vsel %vm428, 0, %v426
  %v433 = vsel %vm428, 0, %v427
  %v434 = vld [vmem:[%s7] sm:$0xf]
  %s435 = scalar_lea.vmem %s7, 4
  %v436 = vld [vmem:[%s435] sm:$0xf]
  %v438 = vsel %vm223, %v422, 0
  %v441 = vsel %vm223, %v423, 0
  %v444 = vsel %vm228, %v436, 0
  %446 = vmatprep.subr.bf16.mxu0 0
  %447 = vmatpush1.bf16.msra.mxu0 %v444
  %448 = vmatprep.subr.bf16.mxu0 0
  %449 = vmatpush1.bf16.msra.mxu0 0
  %450 = vmatprep.subr.bf16.mxu0 0
  %451 = vmatpush1.bf16.msra.mxu0 0
  %452 = vmatprep.subr.bf16.mxu0 0
  %453 = vmatpush1.bf16.msra.mxu0 0
  %454 = vmatprep.subr.bf16.mxu0 0
  %455 = vmatpush1.bf16.msra.mxu0 0
  %456 = vmatprep.subr.bf16.mxu0 0
  %457 = vmatpush1.bf16.msra.mxu0 0
  %458 = vmatprep.subr.bf16.mxu0 0
  %459 = vmatpush1.bf16.msra.mxu0 0
  %460 = vmatprep.subr.bf16.mxu0 0
  %461 = vmatpush1.bf16.msra.mxu0 0
  %462 = vmatprep.subr.bf16.mxu0 0
  %463 = vmatpush1.bf16.msra.mxu0 0
  %464 = vmatprep.subr.bf16.mxu0 0
  %465 = vmatpush1.bf16.msra.mxu0 0
  %466 = vmatprep.subr.bf16.mxu0 0
  %467 = vmatpush1.bf16.msra.mxu0 0
  %468 = vmatprep.subr.bf16.mxu0 0
  %469 = vmatpush1.bf16.msra.mxu0 0
  %470 = vmatprep.subr.bf16.mxu0 0
  %471 = vmatpush1.bf16.msra.mxu0 0
  %472 = vmatprep.subr.bf16.mxu0 0
  %473 = vmatpush1.bf16.msra.mxu0 0
  %474 = vmatprep.subr.bf16.mxu0 0
  %475 = vmatpush1.bf16.msra.mxu0 0
  %476 = vmatprep.subr.bf16.mxu0 0
  %477 = vmatpush1.bf16.msra.mxu0 0
  %478 = vmatprep.mubr.bf16.mxu0 0
  %479 = vmatmul.mubr.bf16.gmra.mrb[0].mxu0 %v438
  %v480 = vpop.f32.mrb[0].mxu0
  %v481 = vadd.f32 0.0, %v480
  %v482 = vpop.f32.mrb[0].mxu0
  %v483 = vpop.f32.mrb[0].mxu0
  %v484 = vadd.f32 0.0, %v483
  %v485 = vpop.f32.mrb[0].mxu0
  %486 = vmatprep.mubr.bf16.mxu0 0
  %487 = vmatmul.mubr.bf16.gmra.mrb[0].mxu0 %v441
  %v488 = vpop.f32.mrb[0].mxu0
  %v489 = vadd.f32 0.0, %v488
  %v490 = vpop.f32.mrb[0].mxu0
  %v491 = vpop.f32.mrb[0].mxu0
  %v492 = vadd.f32 0.0, %v491
  %v493 = vpop.f32.mrb[0].mxu0
  %494 = vdwg.mxu0
  %v495 = vsel %vm223, %v431, 0
  %v497 = vsel %vm223, %v433, 0
  %v500 = vsel %vm228, %v434, 0
  %502 = vmatprep.subr.bf16.mxu0 0
  %503 = vmatpush1.bf16.msra.mxu0 %v500
  %504 = vmatprep.subr.bf16.mxu0 0
  %505 = vmatpush1.bf16.msra.mxu0 0
  %506 = vmatprep.subr.bf16.mxu0 0
  %507 = vmatpush1.bf16.msra.mxu0 0
  %508 = vmatprep.subr.bf16.mxu0 0
  %509 = vmatpush1.bf16.msra.mxu0 0
  %510 = vmatprep.subr.bf16.mxu0 0
  %511 = vmatpush1.bf16.msra.mxu0 0
  %512 = vmatprep.subr.bf16.mxu0 0
  %513 = vmatpush1.bf16.msra.mxu0 0
  %514 = vmatprep.subr.bf16.mxu0 0
  %515 = vmatpush1.bf16.msra.mxu0 0
  %516 = vmatprep.subr.bf16.mxu0 0
  %517 = vmatpush1.bf16.msra.mxu0 0
  %518 = vmatprep.subr.bf16.mxu0 0
  %519 = vmatpush1.bf16.msra.mxu0 0
  %520 = vmatprep.subr.bf16.mxu0 0
  %521 = vmatpush1.bf16.msra.mxu0 0
  %522 = vmatprep.subr.bf16.mxu0 0
  %523 = vmatpush1.bf16.msra.mxu0 0
  %524 = vmatprep.subr.bf16.mxu0 0
  %525 = vmatpush1.bf16.msra.mxu0 0
  %526 = vmatprep.subr.bf16.mxu0 0
  %527 = vmatpush1.bf16.msra.mxu0 0
  %528 = vmatprep.subr.bf16.mxu0 0
  %529 = vmatpush1.bf16.msra.mxu0 0
  %530 = vmatprep.subr.bf16.mxu0 0
  %531 = vmatpush1.bf16.msra.mxu0 0
  %532 = vmatprep.subr.bf16.mxu0 0
  %533 = vmatpush1.bf16.msra.mxu0 0
  %534 = vmatprep.mubr.bf16.mxu0 0
  %535 = vmatmul.mubr.bf16.gmra.mrb[0].mxu0 %v495
  %v536 = vpop.f32.mrb[0].mxu0
  %v537 = vadd.f32 %v481, %v536
  %v538 = vpop.f32.mrb[0].mxu0
  %v539 = vpop.f32.mrb[0].mxu0
  %v540 = vadd.f32 %v484, %v539
  %v541 = vpop.f32.mrb[0].mxu0
  %542 = vmatprep.mubr.bf16.mxu0 0
  %543 = vmatmul.mubr.bf16.gmra.mrb[0].mxu0 %v497
  %v544 = vpop.f32.mrb[0].mxu0
  %v545 = vadd.f32 %v489, %v544
  %v546 = vpop.f32.mrb[0].mxu0
  %v547 = vpop.f32.mrb[0].mxu0
  %v548 = vadd.f32 %v492, %v547
  %v549 = vpop.f32.mrb[0].mxu0
  %550 = vdwg.mxu0
  %v551 = vld [vmem:[%s8] sm:$0x1]
  %v553 = vlaneseq
  %v554 = vshrl.u32 %v553, 7
  %v555 = vsub.s32 0, %v554
  %v556 = vrot.slane %v551, %v555
  %v558 = vadd.f32 %v537, %v556
  %v559 = vadd.f32 %v540, %v556
  %v560 = vadd.f32 %v545, %v556
  %v561 = vadd.f32 %v548, %v556
  %v562 = vmax.f32 %v558, 0.0
  %v563 = vmax.f32 %v559, 0.0
  %v564 = vmax.f32 %v560, 0.0
  %v565 = vmax.f32 %v561, 0.0
  %v566 = vpack.c.bf16 %v563, %v562
  %v567 = vpack.c.bf16 %v565, %v564
  %v570 = vrot.slane %v566, 7
  %v571 = vrot.slane %v567, 7
  %v573 = vsel %vm428, 0, %v570
  %v575 = vsel %vm428, 0, %v571
  %v576 = vld [vmem:[%s9] sm:$0xf]
  %s577 = scalar_lea.vmem %s9, 4
  %v578 = vld [vmem:[%s577] sm:$0xf]
  %v580 = vsel %vm223, %v566, 0
  %v583 = vsel %vm223, %v567, 0
  %v586 = vsel %vm228, %v578, 0
  %588 = vmatprep.subr.bf16.mxu0 0
  %589 = vmatpush1.bf16.msra.mxu0 %v586
  %590 = vmatprep.subr.bf16.mxu0 0
  %591 = vmatpush1.bf16.msra.mxu0 0
  %592 = vmatprep.subr.bf16.mxu0 0
  %593 = vmatpush1.bf16.msra.mxu0 0
  %594 = vmatprep.subr.bf16.mxu0 0
  %595 = vmatpush1.bf16.msra.mxu0 0
  %596 = vmatprep.subr.bf16.mxu0 0
  %597 = vmatpush1.bf16.msra.mxu0 0
  %598 = vmatprep.subr.bf16.mxu0 0
  %599 = vmatpush1.bf16.msra.mxu0 0
  %600 = vmatprep.subr.bf16.mxu0 0
  %601 = vmatpush1.bf16.msra.mxu0 0
  %602 = vmatprep.subr.bf16.mxu0 0
  %603 = vmatpush1.bf16.msra.mxu0 0
  %604 = vmatprep.subr.bf16.mxu0 0
  %605 = vmatpush1.bf16.msra.mxu0 0
  %606 = vmatprep.subr.bf16.mxu0 0
  %607 = vmatpush1.bf16.msra.mxu0 0
  %608 = vmatprep.subr.bf16.mxu0 0
  %609 = vmatpush1.bf16.msra.mxu0 0
  %610 = vmatprep.subr.bf16.mxu0 0
  %611 = vmatpush1.bf16.msra.mxu0 0
  %612 = vmatprep.subr.bf16.mxu0 0
  %613 = vmatpush1.bf16.msra.mxu0 0
  %614 = vmatprep.subr.bf16.mxu0 0
  %615 = vmatpush1.bf16.msra.mxu0 0
  %616 = vmatprep.subr.bf16.mxu0 0
  %617 = vmatpush1.bf16.msra.mxu0 0
  %618 = vmatprep.subr.bf16.mxu0 0
  %619 = vmatpush1.bf16.msra.mxu0 0
  %620 = vmatprep.mubr.bf16.mxu0 0
  %621 = vmatmul.mubr.bf16.gmra.mrb[0].mxu0 %v580
  %v622 = vpop.f32.mrb[0].mxu0
  %v623 = vadd.f32 0.0, %v622
  %v624 = vpop.f32.mrb[0].mxu0
  %v625 = vpop.f32.mrb[0].mxu0
  %v626 = vadd.f32 0.0, %v625
  %v627 = vpop.f32.mrb[0].mxu0
  %628 = vmatprep.mubr.bf16.mxu0 0
  %629 = vmatmul.mubr.bf16.gmra.mrb[0].mxu0 %v583
  %v630 = vpop.f32.mrb[0].mxu0
  %v631 = vadd.f32 0.0, %v630
  %v632 = vpop.f32.mrb[0].mxu0
  %v633 = vpop.f32.mrb[0].mxu0
  %v634 = vadd.f32 0.0, %v633
  %v635 = vpop.f32.mrb[0].mxu0
  %636 = vdwg.mxu0
  %v637 = vsel %vm223, %v573, 0
  %v639 = vsel %vm223, %v575, 0
  %v642 = vsel %vm228, %v576, 0
  %644 = vmatprep.subr.bf16.mxu0 0
  %645 = vmatpush1.bf16.msra.mxu0 %v642
  %646 = vmatprep.subr.bf16.mxu0 0
  %647 = vmatpush1.bf16.msra.mxu0 0
  %648 = vmatprep.subr.bf16.mxu0 0
  %649 = vmatpush1.bf16.msra.mxu0 0
  %650 = vmatprep.subr.bf16.mxu0 0
  %651 = vmatpush1.bf16.msra.mxu0 0
  %652 = vmatprep.subr.bf16.mxu0 0
  %653 = vmatpush1.bf16.msra.mxu0 0
  %654 = vmatprep.subr.bf16.mxu0 0
  %655 = vmatpush1.bf16.msra.mxu0 0
  %656 = vmatprep.subr.bf16.mxu0 0
  %657 = vmatpush1.bf16.msra.mxu0 0
  %658 = vmatprep.subr.bf16.mxu0 0
  %659 = vmatpush1.bf16.msra.mxu0 0
  %660 = vmatprep.subr.bf16.mxu0 0
  %661 = vmatpush1.bf16.msra.mxu0 0
  %662 = vmatprep.subr.bf16.mxu0 0
  %663 = vmatpush1.bf16.msra.mxu0 0
  %664 = vmatprep.subr.bf16.mxu0 0
  %665 = vmatpush1.bf16.msra.mxu0 0
  %666 = vmatprep.subr.bf16.mxu0 0
  %667 = vmatpush1.bf16.msra.mxu0 0
  %668 = vmatprep.subr.bf16.mxu0 0
  %669 = vmatpush1.bf16.msra.mxu0 0
  %670 = vmatprep.subr.bf16.mxu0 0
  %671 = vmatpush1.bf16.msra.mxu0 0
  %672 = vmatprep.subr.bf16.mxu0 0
  %673 = vmatpush1.bf16.msra.mxu0 0
  %674 = vmatprep.subr.bf16.mxu0 0
  %675 = vmatpush1.bf16.msra.mxu0 0
  %676 = vmatprep.mubr.bf16.mxu0 0
  %677 = vmatmul.mubr.bf16.gmra.mrb[0].mxu0 %v637
  %v678 = vpop.f32.mrb[0].mxu0
  %v679 = vadd.f32 %v623, %v678
  %v680 = vpop.f32.mrb[0].mxu0
  %v681 = vpop.f32.mrb[0].mxu0
  %v682 = vadd.f32 %v626, %v681
  %v683 = vpop.f32.mrb[0].mxu0
  %684 = vmatprep.mubr.bf16.mxu0 0
  %685 = vmatmul.mubr.bf16.gmra.mrb[0].mxu0 %v639
  %v686 = vpop.f32.mrb[0].mxu0
  %v687 = vadd.f32 %v631, %v686
  %v688 = vpop.f32.mrb[0].mxu0
  %v689 = vpop.f32.mrb[0].mxu0
  %v690 = vadd.f32 %v634, %v689
  %v691 = vpop.f32.mrb[0].mxu0
  %692 = vdwg.mxu0
  %v693 = vld [vmem:[%s10] sm:$0x1]
  %v695 = vlaneseq
  %v696 = vshrl.u32 %v695, 7
  %v697 = vsub.s32 0, %v696
  %v698 = vrot.slane %v693, %v697
  %v700 = vadd.f32 %v679, %v698
  %v701 = vadd.f32 %v682, %v698
  %v702 = vadd.f32 %v687, %v698
  %v703 = vadd.f32 %v690, %v698
  %v704 = vmax.f32 %v700, 0.0
  %v705 = vmax.f32 %v701, 0.0
  %v706 = vmax.f32 %v702, 0.0
  %v707 = vmax.f32 %v703, 0.0
  %v708 = vadd.f32 %v704, %v418
  %v709 = vadd.f32 %v705, %v419
  %v710 = vadd.f32 %v706, %v420
  %v711 = vadd.f32 %v707, %v421
  %v712 = vmax.f32 %v708, 0.0
  %v713 = vmax.f32 %v709, 0.0
  %v714 = vmax.f32 %v710, 0.0
  %v715 = vmax.f32 %v711, 0.0
  %716 = vst.msk [vmem:[%s11] sm:$0xff] %vm223, %v712
  %717 = vst.msk [vmem:[%s11 + $0x8] sm:$0xff] %vm223, %v713
  %718 = vst.msk [vmem:[%s11 + $0x10] sm:$0xff] %vm223, %v714
  %719 = vst.msk [vmem:[%s11 + $0x18] sm:$0xff] %vm223, %v715
  // Predicated region
  $region46: #{tcn_forward.1} parent=0 // pred_check
    _
  $region47: #{tcn_forward.1} parent=0 // pred_check_branch
    %721 = sbr.rel (0) target = $region49
  $region48: #{tcn_forward.1} parent=0 // pred_region
    _
  $region49: #{tcn_forward.1} parent=0 // pred_fallthru
    _
  // Predicated region
  $region50: #{tcn_forward.1} parent=0 // pred_check
    _
  $region51: #{tcn_forward.1} parent=0 // pred_check_branch
    %723 = sbr.rel (0) target = $region53
  $region52: #{tcn_forward.1} parent=0 // pred_region
    _
  $region53: #{tcn_forward.1} parent=0 // pred_fallthru
    _

</llo_original>
